<compile_context>
chip_gen: v6e
topology: v6e:2x2x1
jax: 0.10.0
libtpu: 0.0.40
codegen_flags: <defaults>
</compile_context>

<pallas_src>
import functools

import jax
import jax.numpy as jnp
from jax.experimental import pallas as pl
from jax.experimental.pallas import tpu as pltpu


def _round_up(x: int, m: int) -> int:
    return (x + m - 1) // m * m


def _fused_mlp_kernel(x_ref, w_ref, b_ref, o_ref, *, n_layers: int):
    """Full MLP on one (tm, D_pad) batch tile; all layers fused, statically unrolled."""
    h = x_ref[...]                                        # (tm, D_pad) bf16
    y = None
    for layer in range(n_layers):                          # static unroll
        y = jnp.dot(h, w_ref[layer], preferred_element_type=jnp.float32)
        y = y + b_ref[layer]                              # (1, D_pad) f32 broadcast
        if layer < n_layers - 1:
            h = jnp.maximum(y, 0.0).astype(jnp.bfloat16)  # ReLU in f32, bf16 MXU feed
    o_ref[...] = y.astype(o_ref.dtype)                    # last layer: no activation


def _row_tile_cap() -> int:
    """Smaller batch tile on chips with <=64 MiB VMEM (v7x); larger on v5e/v6e."""
    try:
        vmem_bytes = pltpu.get_tpu_info().vmem_capacity_bytes
    except Exception:
        vmem_bytes = 128 * 1024 * 1024
    return 256 if vmem_bytes <= 64 * 1024 * 1024 else 512


def pack_mlp_params(params, input_dim: int):
    """Zero-pad every layer to a common lane-dense width (multiple of 128) and stack.

    Returns (w_stack bf16 (L, D_pad, D_pad), b_stack f32 (L, 1, D_pad), D_pad)."""
    dims = [input_dim] + [int(W.shape[1]) for W, _ in params]
    d_pad = max(_round_up(d, 128) for d in dims)
    n_layers = len(params)
    w_stack = jnp.zeros((n_layers, d_pad, d_pad), jnp.bfloat16)
    b_stack = jnp.zeros((n_layers, 1, d_pad), jnp.float32)
    for layer, (W, b) in enumerate(params):
        w_stack = w_stack.at[layer, : W.shape[0], : W.shape[1]].set(
            W.astype(jnp.bfloat16))
        b_stack = b_stack.at[layer, 0, : b.shape[0]].set(b.astype(jnp.float32))
    return w_stack, b_stack, d_pad


@functools.partial(jax.jit, static_argnames=("output_dim",))
def mlp_forward_pallas(w_stack, b_stack, x, output_dim: int) -> jax.Array:
    """Fused MLP forward: one pallas_call over batch tiles."""
    M, K = x.shape
    n_layers, d_pad, _ = w_stack.shape

    tm = min(_row_tile_cap(), _round_up(M, 8))
    m_pad = _round_up(M, tm)
    grid = (m_pad // tm,)

    # Zero-pad batch + feature dims in one op; cast MXU input to bf16.
    x_p = jnp.pad(x.astype(jnp.bfloat16), ((0, m_pad - M), (0, d_pad - K)))

    flops = 2 * m_pad * d_pad * d_pad * n_layers
    bytes_accessed = (m_pad * d_pad * 2                   # x (bf16)
                      + n_layers * d_pad * d_pad * 2      # weights (bf16)
                      + n_layers * d_pad * 4              # biases (f32)
                      + m_pad * d_pad * 4)                # output (f32)

    # VMEM budget: double-buffered x/out tiles + resident weight/bias stack + headroom.
    vmem_need = (2 * tm * d_pad * 2                       # x tiles (bf16, 2 bufs)
                 + 2 * tm * d_pad * 4                     # out tiles (f32, 2 bufs)
                 + 2 * n_layers * d_pad * d_pad * 2       # weight stack (2 bufs)
                 + 2 * n_layers * d_pad * 4               # bias stack (2 bufs)
                 + 4 * tm * d_pad * 4)                    # live f32 intermediates
    vmem_limit = int(min(max(2 * vmem_need, 4 * 1024 * 1024), 96 * 1024 * 1024))

    kernel = functools.partial(_fused_mlp_kernel, n_layers=n_layers)
    out_pad = pl.pallas_call(
        kernel,
        out_shape=jax.ShapeDtypeStruct((m_pad, d_pad), jnp.float32),
        grid=grid,
        in_specs=[
            pl.BlockSpec((tm, d_pad), lambda i: (i, 0)),                  # x tile
            pl.BlockSpec((n_layers, d_pad, d_pad), lambda i: (0, 0, 0)),  # weights (resident)
            pl.BlockSpec((n_layers, 1, d_pad), lambda i: (0, 0, 0)),      # biases (resident)
        ],
        out_specs=pl.BlockSpec((tm, d_pad), lambda i: (i, 0)),
        compiler_params=pltpu.CompilerParams(
            dimension_semantics=("parallel",),
            vmem_limit_bytes=vmem_limit,
        ),
        cost_estimate=pl.CostEstimate(
            flops=flops, transcendentals=0, bytes_accessed=bytes_accessed),
    )(x_p, w_stack, b_stack)

    return out_pad[:M, :output_dim]


def mlp_forward(params, x) -> jax.Array:
    """Convenience wrapper: pack (pad + stack + bf16-cast) params, then run the fused kernel."""
    input_dim = x.shape[1]
    output_dim = int(params[-1][0].shape[1])
    w_stack, b_stack, _ = pack_mlp_params(params, input_dim)
    return mlp_forward_pallas(w_stack, b_stack, x, output_dim)


def init_mlp_params(key, input_dim: int, hidden_dims: tuple, output_dim: int):
    """PyTorch-style (uniform +-1/sqrt(fan_in)) init. W stored as (in, out)."""
    sizes = [input_dim] + list(hidden_dims) + [output_dim]
    params = []
    for i in range(len(sizes) - 1):
        fan_in, fan_out = sizes[i], sizes[i + 1]
        key, kw, kb = jax.random.split(key, 3)
        bound = 1.0 / jnp.sqrt(jnp.float32(fan_in))
        W = jax.random.uniform(kw, (fan_in, fan_out), jnp.float32, -bound, bound)
        b = jax.random.uniform(kb, (fan_out,), jnp.float32, -bound, bound)
        params.append((W, b))
    return params


def mlp_reference(params, x, mxu_dtype=jnp.float32):
    """Pure-JAX reference (optionally with the same bf16 MXU quantization)."""
    h = x.astype(mxu_dtype)
    y = None
    for idx, (W, b) in enumerate(params):
        y = jnp.dot(h, W.astype(mxu_dtype),
                    preferred_element_type=jnp.float32) + b
        if idx != len(params) - 1:
            h = jnp.maximum(y, 0.0).astype(mxu_dtype)
    return y


if __name__ == "__main__":
    key = jax.random.PRNGKey(0)
    key_params, key_x = jax.random.split(key)

    batch = 4
    input_dim = 16
    hidden_dims = (32, 32)
    output_dim = 8

    params = init_mlp_params(key_params, input_dim, hidden_dims, output_dim)
    x = jax.random.normal(key_x, (batch, input_dim), jnp.float32)

    out = mlp_forward(params, x)
    out = jax.block_until_ready(out)
    assert out.shape == (batch, output_dim), out.shape

    # Tight check vs a reference using the same bf16 MXU feed (only f32
    # accumulation-order differences remain).
    ref_bf16 = mlp_reference(params, x, mxu_dtype=jnp.bfloat16)
    assert jnp.allclose(out, ref_bf16, atol=1e-3, rtol=1e-3), (
        "Pallas MLP mismatch vs bf16-MXU reference")

    # Loose sanity check vs the full-f32 reference (catches semantic bugs).
    ref_f32 = mlp_reference(params, x, mxu_dtype=jnp.float32)
    assert jnp.allclose(out, ref_f32, atol=2e-1, rtol=2e-1), (
        "Pallas MLP mismatch vs f32 reference")

    print("KERNEL_OK")
</pallas_src>

<mosaic_0001>
module attributes {stable_mosaic.version = 11 : i64} {
  func.func @_fused_mlp_kernel(%arg0: i32, %arg1: memref<8x128xbf16, #tpu.memory_space<vmem>>, %arg2: memref<3x128x128xbf16, #tpu.memory_space<vmem>>, %arg3: memref<3x1x128xf32, #tpu.memory_space<vmem>>, %arg4: memref<8x128xf32, #tpu.memory_space<vmem>>) attributes {dimension_semantics = [#tpu.dimension_semantics<parallel>], iteration_bounds = array<i64: 1>, scalar_prefetch = 0 : i64, scratch_operands = 0 : i64, tpu.core_type = #tpu.core_type<tc>, window_params = [{transform_indices = @transform_0, window_bounds = array<i64: 8, 128>}, {pipeline_mode = #tpu.pipeline_mode<synchronous>, transform_indices = @transform_1, window_bounds = array<i64: 3, 128, 128>}, {pipeline_mode = #tpu.pipeline_mode<synchronous>, transform_indices = @transform_2, window_bounds = array<i64: 3, 1, 128>}, {transform_indices = @transform_3, window_bounds = array<i64: 8, 128>}]} {
    %c0 = arith.constant 0 : index
    %c0_0 = arith.constant 0 : index
    %0 = vector.load %arg1[%c0, %c0_0] : memref<8x128xbf16, #tpu.memory_space<vmem>>, vector<8x128xbf16>
    %c0_1 = arith.constant 0 : index
    %c0_2 = arith.constant 0 : index
    %c0_3 = arith.constant 0 : index
    %1 = vector.load %arg2[%c0_1, %c0_2, %c0_3] : memref<3x128x128xbf16, #tpu.memory_space<vmem>>, vector<1x128x128xbf16>
    %2 = vector.shape_cast %1 : vector<1x128x128xbf16> to vector<128x128xbf16>
    %cst = arith.constant dense<0.000000e+00> : vector<8x128xf32>
    %3 = tpu.matmul %0, %2, %cst {dimension_numbers = #tpu.dot_dimension_numbers<[1], [0], [0], [1], [0, 0, 1, 1], [], []>} : vector<8x128xbf16>, vector<128x128xbf16>, vector<8x128xf32> -> vector<8x128xf32>
    %c0_4 = arith.constant 0 : index
    %c0_5 = arith.constant 0 : index
    %c0_6 = arith.constant 0 : index
    %4 = vector.load %arg3[%c0_4, %c0_5, %c0_6] : memref<3x1x128xf32, #tpu.memory_space<vmem>>, vector<1x1x128xf32>
    %5 = vector.shape_cast %4 : vector<1x1x128xf32> to vector<1x128xf32>
    %6 = vector.broadcast %5 : vector<1x128xf32> to vector<8x128xf32>
    %7 = arith.addf %3, %6 : vector<8x128xf32>
    %cst_7 = arith.constant 0.000000e+00 : f32
    %8 = vector.broadcast %cst_7 : f32 to vector<8x128xf32>
    %9 = arith.maximumf %7, %8 : vector<8x128xf32>
    %10 = arith.truncf %9 : vector<8x128xf32> to vector<8x128xbf16>
    %c1 = arith.constant 1 : index
    %c0_8 = arith.constant 0 : index
    %c0_9 = arith.constant 0 : index
    %11 = vector.load %arg2[%c1, %c0_8, %c0_9] : memref<3x128x128xbf16, #tpu.memory_space<vmem>>, vector<1x128x128xbf16>
    %12 = vector.shape_cast %11 : vector<1x128x128xbf16> to vector<128x128xbf16>
    %cst_10 = arith.constant dense<0.000000e+00> : vector<8x128xf32>
    %13 = tpu.matmul %10, %12, %cst_10 {dimension_numbers = #tpu.dot_dimension_numbers<[1], [0], [0], [1], [0, 0, 1, 1], [], []>} : vector<8x128xbf16>, vector<128x128xbf16>, vector<8x128xf32> -> vector<8x128xf32>
    %c1_11 = arith.constant 1 : index
    %c0_12 = arith.constant 0 : index
    %c0_13 = arith.constant 0 : index
    %14 = vector.load %arg3[%c1_11, %c0_12, %c0_13] : memref<3x1x128xf32, #tpu.memory_space<vmem>>, vector<1x1x128xf32>
    %15 = vector.shape_cast %14 : vector<1x1x128xf32> to vector<1x128xf32>
    %16 = vector.broadcast %15 : vector<1x128xf32> to vector<8x128xf32>
    %17 = arith.addf %13, %16 : vector<8x128xf32>
    %cst_14 = arith.constant 0.000000e+00 : f32
    %18 = vector.broadcast %cst_14 : f32 to vector<8x128xf32>
    %19 = arith.maximumf %17, %18 : vector<8x128xf32>
    %20 = arith.truncf %19 : vector<8x128xf32> to vector<8x128xbf16>
    %c2 = arith.constant 2 : index
    %c0_15 = arith.constant 0 : index
    %c0_16 = arith.constant 0 : index
    %21 = vector.load %arg2[%c2, %c0_15, %c0_16] : memref<3x128x128xbf16, #tpu.memory_space<vmem>>, vector<1x128x128xbf16>
    %22 = vector.shape_cast %21 : vector<1x128x128xbf16> to vector<128x128xbf16>
    %cst_17 = arith.constant dense<0.000000e+00> : vector<8x128xf32>
    %23 = tpu.matmul %20, %22, %cst_17 {dimension_numbers = #tpu.dot_dimension_numbers<[1], [0], [0], [1], [0, 0, 1, 1], [], []>} : vector<8x128xbf16>, vector<128x128xbf16>, vector<8x128xf32> -> vector<8x128xf32>
    %c2_18 = arith.constant 2 : index
    %c0_19 = arith.constant 0 : index
    %c0_20 = arith.constant 0 : index
    %24 = vector.load %arg3[%c2_18, %c0_19, %c0_20] : memref<3x1x128xf32, #tpu.memory_space<vmem>>, vector<1x1x128xf32>
    %25 = vector.shape_cast %24 : vector<1x1x128xf32> to vector<1x128xf32>
    %26 = vector.broadcast %25 : vector<1x128xf32> to vector<8x128xf32>
    %27 = arith.addf %23, %26 : vector<8x128xf32>
    %c0_21 = arith.constant 0 : index
    %c0_22 = arith.constant 0 : index
    %28 = vector.load %arg4[%c0_21, %c0_22] : memref<8x128xf32, #tpu.memory_space<vmem>>, vector<8x128xf32>
    tpu.vector_store %arg4[%c0_21, %c0_22], %27 {strides = array<i32>} : memref<8x128xf32, #tpu.memory_space<vmem>>, vector<8x128xf32>,
    return
  }
  func.func @transform_0(%arg0: i32) -> (i32, i32) {
    %c0_i32 = arith.constant 0 : i32
    %c0_i32_0 = arith.constant 0 : i32
    return %arg0, %c0_i32 : i32, i32
  }
  func.func @transform_1(%arg0: i32) -> (i32, i32, i32) {
    %c0_i32 = arith.constant 0 : i32
    %c0_i32_0 = arith.constant 0 : i32
    %c0_i32_1 = arith.constant 0 : i32
    %c0_i32_2 = arith.constant 0 : i32
    return %c0_i32, %c0_i32_0, %c0_i32_1 : i32, i32, i32
  }
  func.func @transform_2(%arg0: i32) -> (i32, i32, i32) {
    %c0_i32 = arith.constant 0 : i32
    %c0_i32_0 = arith.constant 0 : i32
    %c0_i32_1 = arith.constant 0 : i32
    %c0_i32_2 = arith.constant 0 : i32
    return %c0_i32, %c0_i32_0, %c0_i32_1 : i32, i32, i32
  }
  func.func @transform_3(%arg0: i32) -> (i32, i32) {
    %c0_i32 = arith.constant 0 : i32
    %c0_i32_0 = arith.constant 0 : i32
    return %arg0, %c0_i32 : i32, i32
  }
}

</mosaic_0001>

<llo_original>
// kernel: mlp_forward_pallas.1
$region0: #{mlp_forward_pallas.1}
  #allocation0 [shape = 'u32[]', space=smem, size = 0x4, offset = 0x4, fixed_abs, tag = 'smem constant byte address 0x4 - core index']
  #allocation1 [shape = 'u32[144,128]{1,0:T(1,128)}', space=vmem, size = 0x12000, scoped, tag = 'internal scratch']
  %s0 = inlined_call_operand.vmem [shape: bf16[8,128], index: 0, kind: input, shape index: {}]
  %s1 = inlined_call_operand.hbm [shape: bf16[3,128,128], index: 1, kind: input, shape index: {}]
  %s2 = inlined_call_operand.vmem [shape: f32[3,1,128], index: 2, kind: input, shape index: {}]
  %s3 = inlined_call_operand.vmem [shape: f32[8,128], index: 3, kind: output, shape index: {}]
  %s4 = sld [smem:[#allocation0]]
  $region26: #{mlp_forward_pallas.1} parent=0
    _
  %s6 = ssub.s32 1, %s4
  %s7 = scalar_select 0, %s6, %s4
  $region1: #{mlp_forward_pallas.1} parent=0
    #allocation2 [shape = 'u8[98304]{0}', space=vmem, size = 0x18000, scoped, tag = 'input window, operand 1, single buffered']
    #allocation3 [shape = 's32[1]{0}', space=sflag, size = 0x4, scoped, tag = 'scoped memory for mlp_forward_pallas.1']
    %8 = vsyncpa [#allocation3], 0
    // Predicated region
    $region2: #{mlp_forward_pallas.1} parent=1 // pred_check
      _
    $region3: #{mlp_forward_pallas.1} parent=1 // pred_check_branch
      %10 = sbr.rel (0) target = $region5
    $region4: #{mlp_forward_pallas.1} parent=1 // pred_region
      _
    $region5: #{mlp_forward_pallas.1} parent=1 // pred_fallthru
      _
    // Predicated region
    $region6: #{mlp_forward_pallas.1} parent=1 // pred_check
      _
    $region7: #{mlp_forward_pallas.1} parent=1 // pred_check_branch
      %12 = sbr.rel (0) target = $region9
    $region8: #{mlp_forward_pallas.1} parent=1 // pred_region
      %s14 = ssub.s32 3072, 3072
      %15 = vsyncadd [#allocation3], %s14
      %s16 = sshll.u32 [#allocation2], 4
      %s17 = int_to_ptr.vmem [resolvable:$true] %s16
      %22 = dma.hbm_to_vmem [thread:$0]  %s1, 3072, %s17, [#allocation3], 64, 64, 4
    $region9: #{mlp_forward_pallas.1} parent=1 // pred_fallthru
      _
    // Predicated region
    $region10: #{mlp_forward_pallas.1} parent=1 // pred_check
      _
    $region11: #{mlp_forward_pallas.1} parent=1 // pred_check_branch
      %24 = sbr.rel (0) target = $region13
    $region12: #{mlp_forward_pallas.1} parent=1 // pred_region
      _
    $region13: #{mlp_forward_pallas.1} parent=1 // pred_fallthru
      _
    // Predicated region
    $region14: #{mlp_forward_pallas.1} parent=1 // pred_check
      _
    $region15: #{mlp_forward_pallas.1} parent=1 // pred_check_branch
      %26 = sbr.rel (0) target = $region17
    $region16: #{mlp_forward_pallas.1} parent=1 // pred_region
      %27 = dma.done [#allocation3], 3072
    $region17: #{mlp_forward_pallas.1} parent=1 // pred_fallthru
      _
    %v29 = vld [vmem:[%s0] sm:$0xf]
    %v30 = vld [vmem:[#allocation2] sm:$0xf]
    %v31 = vld [vmem:[#allocation2 + $0x4] sm:$0xf]
    %v32 = vld [vmem:[#allocation2 + $0x8] sm:$0xf]
    %v33 = vld [vmem:[#allocation2 + $0xc] sm:$0xf]
    %v34 = vld [vmem:[#allocation2 + $0x10] sm:$0xf]
    %v35 = vld [vmem:[#allocation2 + $0x14] sm:$0xf]
    %v36 = vld [vmem:[#allocation2 + $0x18] sm:$0xf]
    %v37 = vld [vmem:[#allocation2 + $0x1c] sm:$0xf]
    %v38 = vld [vmem:[#allocation2 + $0x20] sm:$0xf]
    %v39 = vld [vmem:[#allocation2 + $0x24] sm:$0xf]
    %v40 = vld [vmem:[#allocation2 + $0x28] sm:$0xf]
    %v41 = vld [vmem:[#allocation2 + $0x2c] sm:$0xf]
    %v42 = vld [vmem:[#allocation2 + $0x30] sm:$0xf]
    %v43 = vld [vmem:[#allocation2 + $0x34] sm:$0xf]
    %v44 = vld [vmem:[#allocation2 + $0x38] sm:$0xf]
    %v45 = vld [vmem:[#allocation2 + $0x3c] sm:$0xf]
    %v46 = vld [vmem:[%s2] sm:$0x1]
    %v48 = vlaneseq
    %v49 = vshrl.u32 %v48, 7
    %v50 = vsub.s32 0, %v49
    %v51 = vrot.slane %v46, %v50
    %v69 = vunpack.c.l.b16 %v30
    %v70 = vunpack.c.l.b16 %v31
    %v71 = vunpack.c.l.b16 %v32
    %v72 = vunpack.c.l.b16 %v33
    %v73 = vunpack.c.l.b16 %v34
    %v74 = vunpack.c.l.b16 %v35
    %v75 = vunpack.c.l.b16 %v36
    %v76 = vunpack.c.l.b16 %v37
    %v77 = vunpack.c.l.b16 %v38
    %v78 = vunpack.c.l.b16 %v39
    %v79 = vunpack.c.l.b16 %v40
    %v80 = vunpack.c.l.b16 %v41
    %v81 = vunpack.c.l.b16 %v42
    %v82 = vunpack.c.l.b16 %v43
    %v83 = vunpack.c.l.b16 %v44
    %v84 = vunpack.c.l.b16 %v45
    %v85 = vpack.c.b16 %v70, %v69
    %v86 = vpack.c.b16 %v72, %v71
    %v87 = vpack.c.b16 %v74, %v73
    %v88 = vpack.c.b16 %v76, %v75
    %v89 = vpack.c.b16 %v78, %v77
    %v90 = vpack.c.b16 %v80, %v79
    %v91 = vpack.c.b16 %v82, %v81
    %v92 = vpack.c.b16 %v84, %v83
    %101 = vmatprep.subr.bf16.mxu0 0
    %102 = vmatpush1.bf16.msra.mxu0 %v92
    %103 = vmatprep.subr.bf16.mxu0 0
    %104 = vmatpush1.bf16.msra.mxu0 %v91
    %105 = vmatprep.subr.bf16.mxu0 0
    %106 = vmatpush1.bf16.msra.mxu0 %v90
    %107 = vmatprep.subr.bf16.mxu0 0
    %108 = vmatpush1.bf16.msra.mxu0 %v89
    %109 = vmatprep.subr.bf16.mxu0 0
    %110 = vmatpush1.bf16.msra.mxu0 %v88
    %111 = vmatprep.subr.bf16.mxu0 0
    %112 = vmatpush1.bf16.msra.mxu0 %v87
    %113 = vmatprep.subr.bf16.mxu0 0
    %114 = vmatpush1.bf16.msra.mxu0 %v86
    %115 = vmatprep.subr.bf16.mxu0 0
    %116 = vmatpush1.bf16.msra.mxu0 %v85
    %117 = vmatprep.subr.bf16.mxu0 0
    %118 = vmatpush2.bf16.msra.mxu0 0
    %119 = vmatprep.subr.bf16.mxu0 0
    %120 = vmatpush2.bf16.msra.mxu0 0
    %121 = vmatprep.subr.bf16.mxu0 0
    %122 = vmatpush2.bf16.msra.mxu0 0
    %123 = vmatprep.subr.bf16.mxu0 0
    %124 = vmatpush2.bf16.msra.mxu0 0
    %125 = vmatprep.subr.bf16.mxu0 0
    %126 = vmatpush2.bf16.msra.mxu0 0
    %127 = vmatprep.subr.bf16.mxu0 0
    %128 = vmatpush2.bf16.msra.mxu0 0
    %129 = vmatprep.subr.bf16.mxu0 0
    %130 = vmatpush2.bf16.msra.mxu0 0
    %131 = vmatprep.subr.bf16.mxu0 0
    %132 = vmatpush2.bf16.msra.mxu0 0
    %133 = vmatprep.mubr.bf16.mxu0 0
    %134 = vmatmul.mubr.bf16.gmra.mxu0 %v29
    %v135 = vpop.f32.mrf.mxu0
    %v136 = vadd.f32 %v51, %v135
    %v137 = vpop.f32.mrf.mxu0
    %v138 = vpop.f32.mrf.mxu0
    %v139 = vpop.f32.mrf.mxu0
    %140 = vdwg.mxu0
    %v141 = vmax.f32 %v136, 0.0
    %v142 = vpack.c.bf16 %v141, %v141
    %s143 = scalar_lea.vmem [#allocation2], 64
    %v144 = vld [vmem:[%s143] sm:$0xf]
    %v145 = vld [vmem:[%s143 + $0x4] sm:$0xf]
    %v146 = vld [vmem:[%s143 + $0x8] sm:$0xf]
    %v147 = vld [vmem:[%s143 + $0xc] sm:$0xf]
    %v148 = vld [vmem:[%s143 + $0x10] sm:$0xf]
    %v149 = vld [vmem:[%s143 + $0x14] sm:$0xf]
    %v150 = vld [vmem:[%s143 + $0x18] sm:$0xf]
    %v151 = vld [vmem:[%s143 + $0x1c] sm:$0xf]
    %v152 = vld [vmem:[%s143 + $0x20] sm:$0xf]
    %v153 = vld [vmem:[%s143 + $0x24] sm:$0xf]
    %v154 = vld [vmem:[%s143 + $0x28] sm:$0xf]
    %v155 = vld [vmem:[%s143 + $0x2c] sm:$0xf]
    %v156 = vld [vmem:[%s143 + $0x30] sm:$0xf]
    %v157 = vld [vmem:[%s143 + $0x34] sm:$0xf]
    %v158 = vld [vmem:[%s143 + $0x38] sm:$0xf]
    %v159 = vld [vmem:[%s143 + $0x3c] sm:$0xf]
    %s160 = scalar_lea.vmem %s2, 1
    %v161 = vld [vmem:[%s160] sm:$0x1]
    %v163 = vlaneseq
    %v164 = vshrl.u32 %v163, 7
    %v165 = vsub.s32 0, %v164
    %v166 = vrot.slane %v161, %v165
    %v184 = vunpack.c.l.b16 %v144
    %v185 = vunpack.c.l.b16 %v145
    %v186 = vunpack.c.l.b16 %v146
    %v187 = vunpack.c.l.b16 %v147
    %v188 = vunpack.c.l.b16 %v148
    %v189 = vunpack.c.l.b16 %v149
    %v190 = vunpack.c.l.b16 %v150
    %v191 = vunpack.c.l.b16 %v151
    %v192 = vunpack.c.l.b16 %v152
    %v193 = vunpack.c.l.b16 %v153
    %v194 = vunpack.c.l.b16 %v154
    %v195 = vunpack.c.l.b16 %v155
    %v196 = vunpack.c.l.b16 %v156
    %v197 = vunpack.c.l.b16 %v157
    %v198 = vunpack.c.l.b16 %v158
    %v199 = vunpack.c.l.b16 %v159
    %v200 = vpack.c.b16 %v185, %v184
    %v201 = vpack.c.b16 %v187, %v186
    %v202 = vpack.c.b16 %v189, %v188
    %v203 = vpack.c.b16 %v191, %v190
    %v204 = vpack.c.b16 %v193, %v192
    %v205 = vpack.c.b16 %v195, %v194
    %v206 = vpack.c.b16 %v197, %v196
    %v207 = vpack.c.b16 %v199, %v198
    %216 = vmatprep.subr.bf16.mxu0 0
    %217 = vmatpush1.bf16.msra.mxu0 %v207
    %218 = vmatprep.subr.bf16.mxu0 0
    %219 = vmatpush1.bf16.msra.mxu0 %v206
    %220 = vmatprep.subr.bf16.mxu0 0
    %221 = vmatpush1.bf16.msra.mxu0 %v205
    %222 = vmatprep.subr.bf16.mxu0 0
    %223 = vmatpush1.bf16.msra.mxu0 %v204
    %224 = vmatprep.subr.bf16.mxu0 0
    %225 = vmatpush1.bf16.msra.mxu0 %v203
    %226 = vmatprep.subr.bf16.mxu0 0
    %227 = vmatpush1.bf16.msra.mxu0 %v202
    %228 = vmatprep.subr.bf16.mxu0 0
    %229 = vmatpush1.bf16.msra.mxu0 %v201
    %230 = vmatprep.subr.bf16.mxu0 0
    %231 = vmatpush1.bf16.msra.mxu0 %v200
    %232 = vmatprep.subr.bf16.mxu0 0
    %233 = vmatpush2.bf16.msra.mxu0 0
    %234 = vmatprep.subr.bf16.mxu0 0
    %235 = vmatpush2.bf16.msra.mxu0 0
    %236 = vmatprep.subr.bf16.mxu0 0
    %237 = vmatpush2.bf16.msra.mxu0 0
    %238 = vmatprep.subr.bf16.mxu0 0
    %239 = vmatpush2.bf16.msra.mxu0 0
    %240 = vmatprep.subr.bf16.mxu0 0
    %241 = vmatpush2.bf16.msra.mxu0 0
    %242 = vmatprep.subr.bf16.mxu0 0
    %243 = vmatpush2.bf16.msra.mxu0 0
    %244 = vmatprep.subr.bf16.mxu0 0
    %245 = vmatpush2.bf16.msra.mxu0 0
    %246 = vmatprep.subr.bf16.mxu0 0
    %247 = vmatpush2.bf16.msra.mxu0 0
    %248 = vmatprep.mubr.bf16.mxu0 0
    %249 = vmatmul.mubr.bf16.gmra.mxu0 %v142
    %v250 = vpop.f32.mrf.mxu0
    %v251 = vadd.f32 %v166, %v250
    %v252 = vpop.f32.mrf.mxu0
    %v253 = vpop.f32.mrf.mxu0
    %v254 = vpop.f32.mrf.mxu0
    %255 = vdwg.mxu0
    %v256 = vmax.f32 %v251, 0.0
    %v257 = vpack.c.bf16 %v256, %v256
    %s258 = scalar_lea.vmem [#allocation2], 128
    %v259 = vld [vmem:[%s258] sm:$0xf]
    %v260 = vld [vmem:[%s258 + $0x4] sm:$0xf]
    %v261 = vld [vmem:[%s258 + $0x8] sm:$0xf]
    %v262 = vld [vmem:[%s258 + $0xc] sm:$0xf]
    %v263 = vld [vmem:[%s258 + $0x10] sm:$0xf]
    %v264 = vld [vmem:[%s258 + $0x14] sm:$0xf]
    %v265 = vld [vmem:[%s258 + $0x18] sm:$0xf]
    %v266 = vld [vmem:[%s258 + $0x1c] sm:$0xf]
    %v267 = vld [vmem:[%s258 + $0x20] sm:$0xf]
    %v268 = vld [vmem:[%s258 + $0x24] sm:$0xf]
    %v269 = vld [vmem:[%s258 + $0x28] sm:$0xf]
    %v270 = vld [vmem:[%s258 + $0x2c] sm:$0xf]
    %v271 = vld [vmem:[%s258 + $0x30] sm:$0xf]
    %v272 = vld [vmem:[%s258 + $0x34] sm:$0xf]
    %v273 = vld [vmem:[%s258 + $0x38] sm:$0xf]
    %v274 = vld [vmem:[%s258 + $0x3c] sm:$0xf]
    %s275 = scalar_lea.vmem %s2, 2
    %v276 = vld [vmem:[%s275] sm:$0x1]
    %v278 = vlaneseq
    %v279 = vshrl.u32 %v278, 7
    %v280 = vsub.s32 0, %v279
    %v281 = vrot.slane %v276, %v280
    %v299 = vunpack.c.l.b16 %v259
    %v300 = vunpack.c.l.b16 %v260
    %v301 = vunpack.c.l.b16 %v261
    %v302 = vunpack.c.l.b16 %v262
    %v303 = vunpack.c.l.b16 %v263
    %v304 = vunpack.c.l.b16 %v264
    %v305 = vunpack.c.l.b16 %v265
    %v306 = vunpack.c.l.b16 %v266
    %v307 = vunpack.c.l.b16 %v267
    %v308 = vunpack.c.l.b16 %v268
    %v309 = vunpack.c.l.b16 %v269
    %v310 = vunpack.c.l.b16 %v270
    %v311 = vunpack.c.l.b16 %v271
    %v312 = vunpack.c.l.b16 %v272
    %v313 = vunpack.c.l.b16 %v273
    %v314 = vunpack.c.l.b16 %v274
    %v315 = vpack.c.b16 %v300, %v299
    %v316 = vpack.c.b16 %v302, %v301
    %v317 = vpack.c.b16 %v304, %v303
    %v318 = vpack.c.b16 %v306, %v305
    %v319 = vpack.c.b16 %v308, %v307
    %v320 = vpack.c.b16 %v310, %v309
    %v321 = vpack.c.b16 %v312, %v311
    %v322 = vpack.c.b16 %v314, %v313
    %331 = vmatprep.subr.bf16.mxu0 0
    %332 = vmatpush1.bf16.msra.mxu0 %v322
    %333 = vmatprep.subr.bf16.mxu0 0
    %334 = vmatpush1.bf16.msra.mxu0 %v321
    %335 = vmatprep.subr.bf16.mxu0 0
    %336 = vmatpush1.bf16.msra.mxu0 %v320
    %337 = vmatprep.subr.bf16.mxu0 0
    %338 = vmatpush1.bf16.msra.mxu0 %v319
    %339 = vmatprep.subr.bf16.mxu0 0
    %340 = vmatpush1.bf16.msra.mxu0 %v318
    %341 = vmatprep.subr.bf16.mxu0 0
    %342 = vmatpush1.bf16.msra.mxu0 %v317
    %343 = vmatprep.subr.bf16.mxu0 0
    %344 = vmatpush1.bf16.msra.mxu0 %v316
    %345 = vmatprep.subr.bf16.mxu0 0
    %346 = vmatpush1.bf16.msra.mxu0 %v315
    %347 = vmatprep.subr.bf16.mxu0 0
    %348 = vmatpush2.bf16.msra.mxu0 0
    %349 = vmatprep.subr.bf16.mxu0 0
    %350 = vmatpush2.bf16.msra.mxu0 0
    %351 = vmatprep.subr.bf16.mxu0 0
    %352 = vmatpush2.bf16.msra.mxu0 0
    %353 = vmatprep.subr.bf16.mxu0 0
    %354 = vmatpush2.bf16.msra.mxu0 0
    %355 = vmatprep.subr.bf16.mxu0 0
    %356 = vmatpush2.bf16.msra.mxu0 0
    %357 = vmatprep.subr.bf16.mxu0 0
    %358 = vmatpush2.bf16.msra.mxu0 0
    %359 = vmatprep.subr.bf16.mxu0 0
    %360 = vmatpush2.bf16.msra.mxu0 0
    %361 = vmatprep.subr.bf16.mxu0 0
    %362 = vmatpush2.bf16.msra.mxu0 0
    %363 = vmatprep.mubr.bf16.mxu0 0
    %364 = vmatmul.mubr.bf16.gmra.mxu0 %v257
    %v365 = vpop.f32.mrf.mxu0
    %v366 = vadd.f32 %v281, %v365
    %v367 = vpop.f32.mrf.mxu0
    %v368 = vpop.f32.mrf.mxu0
    %v369 = vpop.f32.mrf.mxu0
    %370 = vdwg.mxu0
    %371 = vst [vmem:[%s3] sm:$0xff] %v366
    // Predicated region
    $region18: #{mlp_forward_pallas.1} parent=1 // pred_check
      _
    $region19: #{mlp_forward_pallas.1} parent=1 // pred_check_branch
      %373 = sbr.rel (0) target = $region21
    $region20: #{mlp_forward_pallas.1} parent=1 // pred_region
      _
    $region21: #{mlp_forward_pallas.1} parent=1 // pred_fallthru
      _
    // Predicated region
    $region22: #{mlp_forward_pallas.1} parent=1 // pred_check
      _
    $region23: #{mlp_forward_pallas.1} parent=1 // pred_check_branch
      %375 = sbr.rel (0) target = $region25
    $region24: #{mlp_forward_pallas.1} parent=1 // pred_region
      _
    $region25: #{mlp_forward_pallas.1} parent=1 // pred_fallthru
      _
    %376 = vsyncpa [#allocation3], 1

</llo_original>
